<compile_context>
chip_gen: v6e
topology: v6e:2x2x1
jax: 0.10.0
libtpu: 0.0.40
codegen_flags: <defaults>
</compile_context>

<pallas_src>
import functools

import jax
import jax.numpy as jnp
from jax.experimental import pallas as pl
from jax.experimental.pallas import tpu as pltpu


def _round_up(x, m):
    return ((x + m - 1) // m) * m


def _train_kernel(it_ref, table_ref, logits_ref, loss_ref, *, tm, n_valid, v_valid):
    """One tm-row tile: logits tile + partial cross-entropy sum for this tile."""
    i = pl.program_id(0)
    vpad = table_ref.shape[1]

    ids = it_ref[...]                                    # (tm, 2) int32: [idx | tgt]
    idx_col = ids[:, 0:1]                                # (tm, 1)
    tgt_col = ids[:, 1:2]                                # (tm, 1)

    # Embedding gather as a one-hot x table MXU matmul (lane-dense Vpad columns).
    col = jax.lax.broadcasted_iota(jnp.int32, (tm, vpad), 1)          # (tm, Vpad)
    one_hot = (col == idx_col).astype(jnp.float32)                    # (tm, Vpad)
    logits = jnp.dot(one_hot, table_ref[...],
                     preferred_element_type=jnp.float32)              # (tm, Vpad) f32
    logits_ref[...] = logits.astype(logits_ref.dtype)

    # Stable log-sum-exp over the valid vocab columns only (pad columns masked
    # AFTER the matmul with a large negative, never -inf inside the table).
    logits_m = jnp.where(col < v_valid, logits, jnp.float32(-1e30))
    m = jnp.max(logits_m, axis=-1, keepdims=True)                     # (tm, 1)
    lse = m + jnp.log(jnp.sum(jnp.exp(logits_m - m),
                              axis=-1, keepdims=True))                # (tm, 1)

    # Fused target pick: select + cross-lane reduce (no second one-hot matmul).
    correct = jnp.sum(jnp.where(col == tgt_col, logits, 0.0),
                      axis=-1, keepdims=True)                         # (tm, 1)

    # Zero out rows beyond the true N (last-tile padding); emit this tile's partial.
    row = i * tm + jax.lax.broadcasted_iota(jnp.int32, (tm, 1), 0)
    per_row = jnp.where(row < n_valid, lse - correct, 0.0)
    loss_ref[0, 0] = jnp.sum(per_row)


def _infer_kernel(idx_ref, table_ref, logits_ref, *, tm):
    """Inference path: embedding gather only, no cross-entropy work."""
    vpad = table_ref.shape[1]
    col = jax.lax.broadcasted_iota(jnp.int32, (tm, vpad), 1)
    one_hot = (col == idx_ref[...]).astype(jnp.float32)
    logits = jnp.dot(one_hot, table_ref[...], preferred_element_type=jnp.float32)
    logits_ref[...] = logits.astype(logits_ref.dtype)


def _pad_table(table, vpad):
    V = table.shape[0]
    return jnp.zeros((vpad, vpad), jnp.float32).at[:V, :V].set(
        table.astype(jnp.float32))


def _compiler_params(use_core_parallel):
    # Plain "parallel" does not engage the second TensorCore on v7x; CORE_PARALLEL
    # does.  Kept behind a flag so the default path lowers on every generation.
    sem = (pltpu.CORE_PARALLEL,) if use_core_parallel else ("parallel",)
    return pltpu.CompilerParams(dimension_semantics=sem,
                                vmem_limit_bytes=32 * 1024 * 1024)


def bigram_forward(idx, table, targets=None, *, tile_rows=2048,
                   logits_dtype=jnp.float32, unpad_logits=True,
                   use_core_parallel=False):
    """Mirrors BigramLanguageModel.forward.

    idx:     (B, T) int token ids
    table:   (V, V) float32 embedding table
    targets: optional (B, T) int token ids

    Returns (logits, loss):
      targets is None, unpad_logits=True : logits (B, T, V), loss None
      targets given,   unpad_logits=True : logits (B*T, V), scalar mean CE loss
      unpad_logits=False                 : padded lane-dense logits (n_pad, 128)
                                           (avoids an extra full HBM pass).
    """
    B, T = idx.shape
    V = table.shape[0]
    N = B * T

    vpad = _round_up(V, 128)                           # lane-dense vocab columns
    tm = min(_round_up(tile_rows, 8), _round_up(N, 8))  # rows per tile (mult. of 8)
    n_pad = _round_up(N, tm)
    num_tiles = n_pad // tm

    table_pad = _pad_table(table, vpad)
    compiler_params = _compiler_params(use_core_parallel)
    out_itemsize = jnp.dtype(logits_dtype).itemsize

    table_spec = pl.BlockSpec((vpad, vpad), lambda i: (0, 0))   # resident across grid
    logits_spec = pl.BlockSpec((tm, vpad), lambda i: (i, 0))

    if targets is None:
        idx_flat = jnp.zeros((n_pad, 1), jnp.int32).at[:N, 0].set(
            idx.reshape(-1).astype(jnp.int32))
        idx_spec = pl.BlockSpec((tm, 1), lambda i: (i, 0))

        logits_pad = pl.pallas_call(
            functools.partial(_infer_kernel, tm=tm),
            grid=(num_tiles,),
            in_specs=[idx_spec, table_spec],
            out_specs=logits_spec,
            out_shape=jax.ShapeDtypeStruct((n_pad, vpad), logits_dtype),
            compiler_params=compiler_params,
            cost_estimate=pl.CostEstimate(
                flops=2 * n_pad * vpad * vpad,
                transcendentals=0,
                bytes_accessed=4 * (vpad * vpad + n_pad)
                + n_pad * vpad * out_itemsize),
        )(idx_flat, table_pad)
        if not unpad_logits:
            return logits_pad, None
        return logits_pad[:N, :V].reshape(B, T, V), None

    # Training path: idx and targets concatenated into one (n_pad, 2) input so the
    # lane-padded VMEM buffer / DMA stream exists once instead of twice.
    it_flat = jnp.zeros((n_pad, 2), jnp.int32)
    it_flat = it_flat.at[:N, 0].set(idx.reshape(-1).astype(jnp.int32))
    it_flat = it_flat.at[:N, 1].set(targets.reshape(-1).astype(jnp.int32))
    it_spec = pl.BlockSpec((tm, 2), lambda i: (i, 0))

    # Per-tile scalar loss partials in SMEM -> no cross-step dependency.
    loss_spec = pl.BlockSpec((1, 1), lambda i: (i, 0),
                             memory_space=pltpu.MemorySpace.SMEM)

    logits_pad, loss_parts = pl.pallas_call(
        functools.partial(_train_kernel, tm=tm, n_valid=N, v_valid=V),
        grid=(num_tiles,),
        in_specs=[it_spec, table_spec],
        out_specs=(logits_spec, loss_spec),
        out_shape=(jax.ShapeDtypeStruct((n_pad, vpad), logits_dtype),
                   jax.ShapeDtypeStruct((num_tiles, 1), jnp.float32)),
        compiler_params=compiler_params,
        cost_estimate=pl.CostEstimate(
            flops=2 * n_pad * vpad * vpad + 6 * n_pad * vpad,
            transcendentals=n_pad * vpad + n_pad,
            bytes_accessed=4 * (vpad * vpad + 2 * n_pad + num_tiles)
            + n_pad * vpad * out_itemsize),
    )(it_flat, table_pad)

    loss = jnp.sum(loss_parts) / jnp.float32(N)        # mean over the true N rows
    if not unpad_logits:
        return logits_pad, loss
    return logits_pad[:N, :V], loss


def bigram_last_logits(idx, table, *, logits_dtype=jnp.float32):
    """generate()-style path: logits of the LAST position only, shape (B, V).

    Avoids writing (and re-reading) T-1 rows of logits that generate() never uses.
    """
    B = idx.shape[0]
    V = table.shape[0]
    vpad = _round_up(V, 128)
    rows = _round_up(B, 8)

    table_pad = _pad_table(table, vpad)
    idx_last = jnp.zeros((rows, 1), jnp.int32).at[:B, 0].set(
        idx[:, -1].astype(jnp.int32))

    logits_pad = pl.pallas_call(
        functools.partial(_infer_kernel, tm=rows),
        grid=(1,),
        in_specs=[pl.BlockSpec((rows, 1), lambda i: (i, 0)),
                  pl.BlockSpec((vpad, vpad), lambda i: (0, 0))],
        out_specs=pl.BlockSpec((rows, vpad), lambda i: (i, 0)),
        out_shape=jax.ShapeDtypeStruct((rows, vpad), logits_dtype),
        compiler_params=pltpu.CompilerParams(
            dimension_semantics=("parallel",),
            vmem_limit_bytes=32 * 1024 * 1024),
    )(idx_last, table_pad)
    # Tiny (B x V) slice; the expensive full-logits slice is avoided entirely here.
    return logits_pad[:B, :V]


# TODO(synk): torch.multinomial sampling inside generate() stays host-side JAX/
# numpy; only the per-step logits are produced by the kernel (bigram_last_logits).


def _reference_forward(idx, table, targets):
    # Pure-JAX reference for a correctness sanity check.
    logits = table[idx.reshape(-1)]                                     # (N, V)
    tgt = targets.reshape(-1)
    lse = jax.scipy.special.logsumexp(logits, axis=-1)
    correct = jnp.take_along_axis(logits, tgt[:, None], axis=-1)[:, 0]
    loss = jnp.mean(lse - correct)
    return logits, loss


if __name__ == "__main__":
    key = jax.random.PRNGKey(0)
    vocab_size = 65          # e.g. tiny-shakespeare character vocab
    B, T = 2, 8

    k_tab, k_idx, k_tgt = jax.random.split(key, 3)
    # nn.Embedding default init: N(0, 1)
    table = jax.random.normal(k_tab, (vocab_size, vocab_size), dtype=jnp.float32)
    idx = jax.random.randint(k_idx, (B, T), 0, vocab_size, dtype=jnp.int32)
    targets = jax.random.randint(k_tgt, (B, T), 0, vocab_size, dtype=jnp.int32)

    ref_logits, ref_loss = _reference_forward(idx, table, targets)

    # Training path (default: exact (B*T, V) logits + scalar mean CE loss).
    logits, loss = bigram_forward(idx, table, targets)
    jax.block_until_ready((logits, loss))
    assert logits.shape == (B * T, vocab_size)
    assert jnp.allclose(logits, ref_logits, atol=1e-5), "logits mismatch"
    assert jnp.allclose(loss, ref_loss, atol=1e-5), "loss mismatch"

    # Padded-output path (skips the wrapper-side [:N, :V] HBM re-copy).
    logits_pad, loss_p = bigram_forward(idx, table, targets, unpad_logits=False)
    jax.block_until_ready((logits_pad, loss_p))
    assert logits_pad.shape[1] == 128
    assert jnp.allclose(logits_pad[:B * T, :vocab_size], ref_logits, atol=1e-5)
    assert jnp.allclose(loss_p, ref_loss, atol=1e-5)

    # Inference path: (B, T, V) logits, loss None, no CE work in the kernel.
    logits3d, loss_none = bigram_forward(idx, table, None)
    jax.block_until_ready(logits3d)
    assert loss_none is None
    assert logits3d.shape == (B, T, vocab_size)
    assert jnp.allclose(logits3d.reshape(B * T, vocab_size), ref_logits, atol=1e-5)

    # generate()-style path: only the last position's logits are materialized.
    last = bigram_last_logits(idx, table)
    jax.block_until_ready(last)
    assert last.shape == (B, vocab_size)
    assert jnp.allclose(last, table[idx[:, -1]], atol=1e-5)

    # bf16 logits output: loss is still computed in f32 inside the kernel.
    logits_bf16, loss_bf16 = bigram_forward(idx, table, targets,
                                            logits_dtype=jnp.bfloat16)
    jax.block_until_ready((logits_bf16, loss_bf16))
    assert logits_bf16.dtype == jnp.bfloat16
    assert jnp.allclose(loss_bf16, ref_loss, atol=1e-5)
    assert jnp.allclose(logits_bf16.astype(jnp.float32), ref_logits, atol=5e-2)

    # Multi-tile path: exercises the grid, the padded rows of the last tile and the
    # per-tile loss partials (N = 1000, tile_rows=256 -> 4 tiles, last tile 232 valid).
    B2, T2 = 4, 250
    k_i2, k_t2 = jax.random.split(jax.random.PRNGKey(1))
    idx2 = jax.random.randint(k_i2, (B2, T2), 0, vocab_size, dtype=jnp.int32)
    tgt2 = jax.random.randint(k_t2, (B2, T2), 0, vocab_size, dtype=jnp.int32)
    logits2, loss2 = bigram_forward(idx2, table, tgt2, tile_rows=256)
    jax.block_until_ready((logits2, loss2))
    ref_logits2, ref_loss2 = _reference_forward(idx2, table, tgt2)
    assert jnp.allclose(logits2, ref_logits2, atol=1e-5), "multi-tile logits mismatch"
    assert jnp.allclose(loss2, ref_loss2, atol=1e-4), "multi-tile loss mismatch"

    print("KERNEL_OK")
</pallas_src>

<mosaic_0001>
module attributes {stable_mosaic.version = 11 : i64} {
  func.func @_train_kernel(%arg0: i32, %arg1: memref<16x2xi32, #tpu.memory_space<vmem>>, %arg2: memref<128x128xf32, #tpu.memory_space<vmem>>, %arg3: memref<16x128xf32, #tpu.memory_space<vmem>>, %arg4: memref<1x1xf32, #tpu.memory_space<smem>>) attributes {dimension_semantics = [#tpu.dimension_semantics<parallel>], iteration_bounds = array<i64: 1>, scalar_prefetch = 0 : i64, scratch_operands = 0 : i64, tpu.core_type = #tpu.core_type<tc>, window_params = [{transform_indices = @transform_0, window_bounds = array<i64: 16, 2>}, {pipeline_mode = #tpu.pipeline_mode<synchronous>, transform_indices = @transform_1, window_bounds = array<i64: 128, 128>}, {transform_indices = @transform_2, window_bounds = array<i64: 16, 128>}, {transform_indices = @transform_3, window_bounds = array<i64: 1, 1>}]} {
    %c0 = arith.constant 0 : index
    %c0_0 = arith.constant 0 : index
    %0 = vector.load %arg1[%c0, %c0_0] : memref<16x2xi32, #tpu.memory_space<vmem>>, vector<16x2xi32>
    %1 = vector.extract_strided_slice %0 {offsets = [0, 0], sizes = [16, 1], strides = [1, 1]} : vector<16x2xi32> to vector<16x1xi32>
    %2 = vector.extract_strided_slice %0 {offsets = [0, 1], sizes = [16, 1], strides = [1, 1]} : vector<16x2xi32> to vector<16x1xi32>
    %3 = tpu.iota {dimensions = array<i32: 1>} : vector<16x128xi32>
    %4 = vector.broadcast %1 : vector<16x1xi32> to vector<16x128xi32>
    %5 = arith.cmpi eq, %3, %4 : vector<16x128xi32>
    %6 = arith.extui %5 : vector<16x128xi1> to vector<16x128xi32>
    %7 = arith.sitofp %6 : vector<16x128xi32> to vector<16x128xf32>
    %c0_1 = arith.constant 0 : index
    %c0_2 = arith.constant 0 : index
    %8 = vector.load %arg2[%c0_1, %c0_2] : memref<128x128xf32, #tpu.memory_space<vmem>>, vector<128x128xf32>
    %cst = arith.constant dense<0.000000e+00> : vector<16x128xf32>
    %9 = tpu.matmul %7, %8, %cst {dimension_numbers = #tpu.dot_dimension_numbers<[1], [0], [0], [1], [0, 0, 1, 1], [], []>} : vector<16x128xf32>, vector<128x128xf32>, vector<16x128xf32> -> vector<16x128xf32>
    %c0_3 = arith.constant 0 : index
    %c0_4 = arith.constant 0 : index
    %10 = vector.load %arg3[%c0_3, %c0_4] : memref<16x128xf32, #tpu.memory_space<vmem>>, vector<16x128xf32>
    tpu.vector_store %arg3[%c0_3, %c0_4], %9 {strides = array<i32>} : memref<16x128xf32, #tpu.memory_space<vmem>>, vector<16x128xf32>,
    %c65_i32 = arith.constant 65 : i32
    %11 = vector.broadcast %c65_i32 : i32 to vector<16x128xi32>
    %12 = arith.cmpi slt, %3, %11 : vector<16x128xi32>
    %cst_5 = arith.constant -1.000000e+30 : f32
    %13 = vector.broadcast %cst_5 : f32 to vector<16x128xf32>
    %14 = arith.select %12, %9, %13 : vector<16x128xi1>, vector<16x128xf32>
    %cst_6 = arith.constant dense<0xFF800000> : vector<16xf32>
    %15 = vector.multi_reduction <maximumf>, %14, %cst_6 [1] : vector<16x128xf32> to vector<16xf32>
    %16 = vector.shape_cast %15 : vector<16xf32> to vector<16x1xf32>
    %17 = vector.broadcast %16 : vector<16x1xf32> to vector<16x128xf32>
    %18 = arith.subf %14, %17 : vector<16x128xf32>
    %19 = math.exp %18 : vector<16x128xf32>
    %cst_7 = arith.constant dense<0.000000e+00> : vector<16xf32>
    %20 = vector.multi_reduction <add>, %19, %cst_7 [1] : vector<16x128xf32> to vector<16xf32>
    %21 = vector.shape_cast %20 : vector<16xf32> to vector<16x1xf32>
    %22 = math.log %21 : vector<16x1xf32>
    %23 = arith.addf %16, %22 : vector<16x1xf32>
    %24 = vector.broadcast %2 : vector<16x1xi32> to vector<16x128xi32>
    %25 = arith.cmpi eq, %3, %24 : vector<16x128xi32>
    %cst_8 = arith.constant 0.000000e+00 : f32
    %26 = vector.broadcast %cst_8 : f32 to vector<16x128xf32>
    %27 = arith.select %25, %9, %26 : vector<16x128xi1>, vector<16x128xf32>
    %cst_9 = arith.constant dense<0.000000e+00> : vector<16xf32>
    %28 = vector.multi_reduction <add>, %27, %cst_9 [1] : vector<16x128xf32> to vector<16xf32>
    %29 = vector.shape_cast %28 : vector<16xf32> to vector<16x1xf32>
    %c16_i32 = arith.constant 16 : i32
    %30 = arith.muli %arg0, %c16_i32 : i32
    %31 = tpu.iota {dimensions = array<i32: 0>} : vector<16x1xi32>
    %32 = vector.broadcast %30 : i32 to vector<16x1xi32>
    %33 = arith.addi %32, %31 : vector<16x1xi32>
    %c16_i32_10 = arith.constant 16 : i32
    %34 = vector.broadcast %c16_i32_10 : i32 to vector<16x1xi32>
    %35 = arith.cmpi slt, %33, %34 : vector<16x1xi32>
    %36 = arith.subf %23, %29 : vector<16x1xf32>
    %cst_11 = arith.constant 0.000000e+00 : f32
    %37 = vector.broadcast %cst_11 : f32 to vector<16x1xf32>
    %38 = arith.select %35, %36, %37 : vector<16x1xi1>, vector<16x1xf32>
    %39 = vector.shape_cast %38 : vector<16x1xf32> to vector<1x16x1xf32>
    %cst_12 = arith.constant dense<0.000000e+00> : vector<1xf32>
    %40 = vector.multi_reduction <add>, %39, %cst_12 [1, 2] : vector<1x16x1xf32> to vector<1xf32>
    %41 = vector.shape_cast %40 : vector<1xf32> to vector<1x1x1xf32>
    %42 = vector.extract %41[0, 0, 0] : f32 from vector<1x1x1xf32>
    %c0_13 = arith.constant 0 : index
    %c0_14 = arith.constant 0 : index
    %43 = memref.load %arg4[%c0_13, %c0_14] : memref<1x1xf32, #tpu.memory_space<smem>>
    memref.store %42, %arg4[%c0_13, %c0_14] : memref<1x1xf32, #tpu.memory_space<smem>>
    return
  }
  func.func @transform_0(%arg0: i32) -> (i32, i32) {
    %c0_i32 = arith.constant 0 : i32
    %c0_i32_0 = arith.constant 0 : i32
    return %arg0, %c0_i32 : i32, i32
  }
  func.func @transform_1(%arg0: i32) -> (i32, i32) {
    %c0_i32 = arith.constant 0 : i32
    %c0_i32_0 = arith.constant 0 : i32
    %c0_i32_1 = arith.constant 0 : i32
    return %c0_i32, %c0_i32_0 : i32, i32
  }
  func.func @transform_2(%arg0: i32) -> (i32, i32) {
    %c0_i32 = arith.constant 0 : i32
    %c0_i32_0 = arith.constant 0 : i32
    return %arg0, %c0_i32 : i32, i32
  }
  func.func @transform_3(%arg0: i32) -> (i32, i32) {
    %c0_i32 = arith.constant 0 : i32
    %c0_i32_0 = arith.constant 0 : i32
    return %arg0, %c0_i32 : i32, i32
  }
}

</mosaic_0001>

<llo_original>
// kernel: tpu_custom_call.1
$region0: #{tpu_custom_call.1}
  #allocation0 [shape = 'u32[]', space=smem, size = 0x4, offset = 0x4, fixed_abs, tag = 'smem constant byte address 0x4 - core index']
  #allocation1 [shape = 'u32[144,128]{1,0:T(1,128)}', space=vmem, size = 0x12000, scoped, tag = 'internal scratch']
  %s0 = inlined_call_operand.vmem [shape: s32[16,2], index: 0, kind: input, shape index: {}]
  %s1 = inlined_call_operand.hbm [shape: f32[128,128], index: 1, kind: input, shape index: {}]
  %s2 = inlined_call_operand.hbm [shape: f32[16,128], index: 2, kind: output, shape index: {0}]
  %s3 = inlined_call_operand.hbm [shape: f32[1,1], index: 3, kind: output, shape index: {1}]
  %4 = xla_tuple %s2, %s3
  %s5 = sld [smem:[#allocation0]]
  $region30: #{tpu_custom_call.1} parent=0
    _
  %s7 = ssub.s32 1, %s5
  %s8 = scalar_select 0, %s7, %s5
  $region1: #{tpu_custom_call.1} parent=0
    #allocation2 [shape = 'u8[65536]{0}', space=vmem, size = 0x10000, scoped, tag = 'input window, operand 1, single buffered']
    #allocation3 [shape = 's32[1]{0}', space=sflag, size = 0x4, scoped, tag = 'scoped memory for tpu_custom_call.1']
    #allocation4 [shape = 's32[1]{0}', space=sflag, size = 0x4, scoped, tag = 'scoped memory for tpu_custom_call.1']
    #allocation5 [shape = 's32[1]{0}', space=sflag, size = 0x4, scoped, tag = 'scoped memory for tpu_custom_call.1']
    #allocation6 [shape = 'u8[8192]{0}', space=vmem, size = 0x2000, scoped, tag = 'output window, operand 0, single buffered']
    #allocation7 [shape = 'u8[512]{0}', space=smem, size = 0x200, scoped, tag = 'output window, operand 1, single buffered']
    %9 = vsyncpa [#allocation3], 0
    %10 = vsyncpa [#allocation4], 0
    %11 = vsyncpa [#allocation5], 0
    // Predicated region
    $region2: #{tpu_custom_call.1} parent=1 // pred_check
      _
    $region3: #{tpu_custom_call.1} parent=1 // pred_check_branch
      %13 = sbr.rel (0) target = $region5
    $region4: #{tpu_custom_call.1} parent=1 // pred_region
      _
    $region5: #{tpu_custom_call.1} parent=1 // pred_fallthru
      _
    // Predicated region
    $region6: #{tpu_custom_call.1} parent=1 // pred_check
      _
    $region7: #{tpu_custom_call.1} parent=1 // pred_check_branch
      %15 = sbr.rel (0) target = $region9
    $region8: #{tpu_custom_call.1} parent=1 // pred_region
      %s17 = ssub.s32 2048, 2048
      %18 = vsyncadd [#allocation3], %s17
      %s19 = sshll.u32 [#allocation2], 4
      %s20 = int_to_ptr.vmem [resolvable:$true] %s19
      %25 = dma.hbm_to_vmem [thread:$0]  %s1, 2048, %s20, [#allocation3], 128, 128, 8
    $region9: #{tpu_custom_call.1} parent=1 // pred_fallthru
      _
    // Predicated region
    $region10: #{tpu_custom_call.1} parent=1 // pred_check
      _
    $region11: #{tpu_custom_call.1} parent=1 // pred_check_branch
      %27 = sbr.rel (0) target = $region13
    $region12: #{tpu_custom_call.1} parent=1 // pred_region
      %28 = dma.done [#allocation3], 2048
    $region13: #{tpu_custom_call.1} parent=1 // pred_fallthru
      _
    %v29 = vld [vmem:[%s0] sm:$0xff]
    %v30 = vld [vmem:[%s0 + $0x8] sm:$0xff]
    %v31 = vlaneseq
    %v32 = vand.u32 %v31, 127
    %33 = vset.pattern.permute.xlu0 0
    %34 = vperm.xlu0 %33, %v29
    %v35 = vpop.permute.xlu0 %34
    %36 = vset.pattern.permute.xlu0 0
    %37 = vperm.xlu0 %36, %v30
    %v38 = vpop.permute.xlu0 %37
    %vm39 = vcmp.eq.s32.totalorder %v32, %v35
    %vm40 = vcmp.eq.s32.totalorder %v32, %v38
    %v41 = vsel %vm39, 1, 0
    %v42 = vsel %vm40, 1, 0
    %v43 = vcvt.s32.f32 %v41
    %v44 = vcvt.s32.f32 %v42
    %v45 = vld [vmem:[#allocation2] sm:$0xff]
    %v46 = vld [vmem:[#allocation2 + $0x8] sm:$0xff]
    %v47 = vld [vmem:[#allocation2 + $0x10] sm:$0xff]
    %v48 = vld [vmem:[#allocation2 + $0x18] sm:$0xff]
    %v49 = vld [vmem:[#allocation2 + $0x20] sm:$0xff]
    %v50 = vld [vmem:[#allocation2 + $0x28] sm:$0xff]
    %v51 = vld [vmem:[#allocation2 + $0x30] sm:$0xff]
    %v52 = vld [vmem:[#allocation2 + $0x38] sm:$0xff]
    %v53 = vld [vmem:[#allocation2 + $0x40] sm:$0xff]
    %v54 = vld [vmem:[#allocation2 + $0x48] sm:$0xff]
    %v55 = vld [vmem:[#allocation2 + $0x50] sm:$0xff]
    %v56 = vld [vmem:[#allocation2 + $0x58] sm:$0xff]
    %v57 = vld [vmem:[#allocation2 + $0x60] sm:$0xff]
    %v58 = vld [vmem:[#allocation2 + $0x68] sm:$0xff]
    %v59 = vld [vmem:[#allocation2 + $0x70] sm:$0xff]
    %v60 = vld [vmem:[#allocation2 + $0x78] sm:$0xff]
    %61 = vmatprep.subr.mxu0 0.0
    %62 = vmatpush1.msra.mxu0 %v60
    %63 = vmatprep.subr.mxu0 0.0
    %64 = vmatpush1.msra.mxu0 %v59
    %65 = vmatprep.subr.mxu0 0.0
    %66 = vmatpush1.msra.mxu0 %v58
    %67 = vmatprep.subr.mxu0 0.0
    %68 = vmatpush1.msra.mxu0 %v57
    %69 = vmatprep.subr.mxu0 0.0
    %70 = vmatpush1.msra.mxu0 %v56
    %71 = vmatprep.subr.mxu0 0.0
    %72 = vmatpush1.msra.mxu0 %v55
    %73 = vmatprep.subr.mxu0 0.0
    %74 = vmatpush1.msra.mxu0 %v54
    %75 = vmatprep.subr.mxu0 0.0
    %76 = vmatpush1.msra.mxu0 %v53
    %77 = vmatprep.subr.mxu0 0.0
    %78 = vmatpush1.msra.mxu0 %v52
    %79 = vmatprep.subr.mxu0 0.0
    %80 = vmatpush1.msra.mxu0 %v51
    %81 = vmatprep.subr.mxu0 0.0
    %82 = vmatpush1.msra.mxu0 %v50
    %83 = vmatprep.subr.mxu0 0.0
    %84 = vmatpush1.msra.mxu0 %v49
    %85 = vmatprep.subr.mxu0 0.0
    %86 = vmatpush1.msra.mxu0 %v48
    %87 = vmatprep.subr.mxu0 0.0
    %88 = vmatpush1.msra.mxu0 %v47
    %89 = vmatprep.subr.mxu0 0.0
    %90 = vmatpush1.msra.mxu0 %v46
    %91 = vmatprep.subr.mxu0 0.0
    %92 = vmatpush1.msra.mxu0 %v45
    %93 = vmatprep.subr.mxu0 0.0
    %94 = vmatpush2.msra.mxu0 0.0
    %95 = vmatprep.subr.mxu0 0.0
    %96 = vmatpush2.msra.mxu0 0.0
    %97 = vmatprep.subr.mxu0 0.0
    %98 = vmatpush2.msra.mxu0 0.0
    %99 = vmatprep.subr.mxu0 0.0
    %100 = vmatpush2.msra.mxu0 0.0
    %101 = vmatprep.subr.mxu0 0.0
    %102 = vmatpush2.msra.mxu0 0.0
    %103 = vmatprep.subr.mxu0 0.0
    %104 = vmatpush2.msra.mxu0 0.0
    %105 = vmatprep.subr.mxu0 0.0
    %106 = vmatpush2.msra.mxu0 0.0
    %107 = vmatprep.subr.mxu0 0.0
    %108 = vmatpush2.msra.mxu0 0.0
    %109 = vmatprep.subr.mxu0 0.0
    %110 = vmatpush2.msra.mxu0 0.0
    %111 = vmatprep.subr.mxu0 0.0
    %112 = vmatpush2.msra.mxu0 0.0
    %113 = vmatprep.subr.mxu0 0.0
    %114 = vmatpush2.msra.mxu0 0.0
    %115 = vmatprep.subr.mxu0 0.0
    %116 = vmatpush2.msra.mxu0 0.0
    %117 = vmatprep.subr.mxu0 0.0
    %118 = vmatpush2.msra.mxu0 0.0
    %119 = vmatprep.subr.mxu0 0.0
    %120 = vmatpush2.msra.mxu0 0.0
    %121 = vmatprep.subr.mxu0 0.0
    %122 = vmatpush2.msra.mxu0 0.0
    %123 = vmatprep.subr.mxu0 0.0
    %124 = vmatpush2.msra.mxu0 0.0
    %125 = vmatprep.mubr.f32.mxu0 0.0
    %126 = vmatmul.mubr.f32.gmra.mxu0 %v43
    %v127 = vpop.f32.mrf.mxu0
    %v128 = vadd.f32 0.0, %v127
    %v129 = vpop.f32.mrf.mxu0
    %130 = vmatprep.mubr.f32.mxu0 0.0
    %131 = vmatmul.mubr.f32.gmra.mxu0 %v44
    %v132 = vpop.f32.mrf.mxu0
    %v133 = vadd.f32 0.0, %v132
    %v134 = vpop.f32.mrf.mxu0
    %135 = vdwg.mxu0
    %136 = vst [vmem:[#allocation6] sm:$0xff] %v128
    %137 = vst [vmem:[#allocation6 + $0x8] sm:$0xff] %v133
    %vm138 = vcmp.lt.s32.totalorder %v32, 65
    %v139 = vsel %vm138, %v128, -1e+30
    %v140 = vsel %vm138, %v133, -1e+30
    %141 = vmax.xlane.f32.xlu0 %v139
    %v142 = vpop.xlane.xlu0 %141
    %143 = vmax.xlane.f32.xlu0 %v140
    %v144 = vpop.xlane.xlu0 %143
    %v145 = vsub.f32 %v139, %v142
    %v146 = vsub.f32 %v140, %v144
    %v147 = vmul.f32 %v145, 1.442695
    %v148 = vpow.pop %v147
    %v149 = vmul.f32 %v146, 1.442695
    %v150 = vpow.pop %v149
    %151 = vadd.xlane.f32.xlu0 %v148
    %v152 = vpop.xlane.xlu0 %151
    %153 = vadd.xlane.f32.xlu0 %v150
    %v154 = vpop.xlane.xlu0 %153
    %v155 = vlog2.pop %v152
    %v156 = vmul.f32 %v155, 0.6931472
    %v157 = vlog2.pop %v154
    %v158 = vmul.f32 %v157, 0.6931472
    %v159 = vadd.f32 %v142, %v156
    %v160 = vadd.f32 %v144, %v158
    %161 = vset.pattern.permute.xlu0 1
    %162 = vperm.xlu0 %161, %v29
    %v163 = vpop.permute.xlu0 %162
    %164 = vset.pattern.permute.xlu0 1
    %165 = vperm.xlu0 %164, %v30
    %v166 = vpop.permute.xlu0 %165
    %vm167 = vcmp.eq.s32.totalorder %v32, %v163
    %vm168 = vcmp.eq.s32.totalorder %v32, %v166
    %v169 = vsel %vm167, %v128, 0.0
    %v170 = vsel %vm168, %v133, 0.0
    %171 = vadd.xlane.f32.xlu0 %v169
    %v172 = vpop.xlane.xlu0 %171
    %173 = vadd.xlane.f32.xlu0 %v170
    %v174 = vpop.xlane.xlu0 %173
    %s175 = smul.u32 0, 16
    %v176 = vlaneseq
    %v177 = vshrl.u32 %v176, 7
    %v178 = vadd.s32 %v177, 8
    %v179 = vstv %s175
    %v180 = vadd.s32 %v179, %v177
    %v181 = vadd.s32 %v179, %v178
    %vm182 = vcmp.lt.s32.totalorder %v180, 16
    %vm183 = vcmp.lt.s32.totalorder %v181, 16
    %v184 = vsub.f32 %v159, %v172
    %v185 = vsub.f32 %v160, %v174
    %v186 = vsel %vm182, %v184, 0.0
    %v187 = vsel %vm183, %v185, 0.0
    %vm188 = vcmask 7168
    %v189 = vsel %vm188, %v186, 0.0
    %v190 = vsel %vm188, %v187, 0.0
    %v191 = vadd.f32 %v189, %v190
    %192 = vadd.xlane.f32.xlu0 %v191
    %v193 = vpop.xlane.xlu0 %192
    %v194 = vrot.slane %v193, 4
    %v195 = vadd.f32 %v193, %v194
    %v196 = vrot.slane %v195, 2
    %v197 = vadd.f32 %v195, %v196
    %v198 = vrot.slane %v197, 1
    %v199 = vadd.f32 %v197, %v198
    %s200 = vtos %v199
    %s201 = scalar_lea.smem [#allocation7], 0
    %202 = sst [smem:[%s201]] %s200
    // Predicated region
    $region14: #{tpu_custom_call.1} parent=1 // pred_check
      _
    $region15: #{tpu_custom_call.1} parent=1 // pred_check_branch
      %204 = sbr.rel (0) target = $region17
    $region16: #{tpu_custom_call.1} parent=1 // pred_region
      %s206 = ssub.s32 256, 256
      %207 = vsyncadd [#allocation4], %s206
      %s208 = sshll.u32 [#allocation6], 4
      %s209 = int_to_ptr.vmem [resolvable:$true] %s208
      %214 = dma.vmem_to_hbm [thread:$0]  %s209, 256, %s2, [#allocation4], 128, 128, 8
    $region17: #{tpu_custom_call.1} parent=1 // pred_fallthru
      _
    // Predicated region
    $region18: #{tpu_custom_call.1} parent=1 // pred_check
      _
    $region19: #{tpu_custom_call.1} parent=1 // pred_check_branch
      %216 = sbr.rel (0) target = $region21
    $region20: #{tpu_custom_call.1} parent=1 // pred_region
      %s218 = ssub.s32 16, 16
      %219 = vsyncadd [#allocation5], %s218
      %222 = dma.smem_to_hbm [#allocation7], 16, %s3, [#allocation5]
    $region21: #{tpu_custom_call.1} parent=1 // pred_fallthru
      _
    // Predicated region
    $region22: #{tpu_custom_call.1} parent=1 // pred_check
      _
    $region23: #{tpu_custom_call.1} parent=1 // pred_check_branch
      %224 = sbr.rel (0) target = $region25
    $region24: #{tpu_custom_call.1} parent=1 // pred_region
      %225 = dma.done [#allocation4], 256
    $region25: #{tpu_custom_call.1} parent=1 // pred_fallthru
      _
    // Predicated region
    $region26: #{tpu_custom_call.1} parent=1 // pred_check
      _
    $region27: #{tpu_custom_call.1} parent=1 // pred_check_branch
      %227 = sbr.rel (0) target = $region29
    $region28: #{tpu_custom_call.1} parent=1 // pred_region
      %228 = dma.done [#allocation5], 16
    $region29: #{tpu_custom_call.1} parent=1 // pred_fallthru
      _
    %229 = sfence
    %230 = vsyncpa [#allocation3], 1
    %231 = vsyncpa [#allocation4], 1
    %232 = vsyncpa [#allocation5], 1

</llo_original>
